<compile_context>
chip_gen: v7x
topology: tpu7x:2x2x1
jax: 0.10.0
libtpu: 0.0.40
codegen_flags: <defaults>
</compile_context>

<pallas_src>
import functools

import jax
import jax.numpy as jnp
from jax import lax
from jax.experimental import pallas as pl
from jax.experimental.pallas import tpu as pltpu


def _round_up(x, m):
    return (x + m - 1) // m * m


def _vmem_budget_bytes():
    """Generation-aware VMEM request: ~75% of physical per-core VMEM.

    v5e/v6e: 128 MiB physical -> ~96 MiB budget.  v7x: 64 MiB -> ~48 MiB.
    Falls back to the v7x-safe number if the query is unavailable (e.g. when
    running under the CPU interpreter).
    """
    cap = 64 * 1024 * 1024
    try:
        info = pltpu.get_tpu_info()
        cap = int(getattr(info, "vmem_capacity_bytes", cap))
    except Exception:
        pass
    return int(min(cap * 3 // 4, 100 * 1024 * 1024))


def _step_vmem_bytes(tm, ntoken):
    """Rough per-grid-step VMEM footprint of the fused kernel (bytes)."""
    ids = 2 * tm * 128 * 4                              # (tm,1) int32 tile, lane-padded, 2 bufs
    out = 2 * tm * ntoken * 4                           # f32 output tile, 2 bufs
    onehot = tm * ntoken * 2                            # bf16 one-hot
    work = 2 * tm * ntoken * 4                          # logits + exp f32 live values
    resident = 2 * (ntoken * ntoken * 2 + ntoken * 4)   # EW (bf16) + bias, 2 bufs
    return ids + out + onehot + work + resident


def enc_dec_kernel(ids_ref, ew_ref, b_ref, out_ref):
    """One grid step handles a tile of TM token rows.

    ids_ref: (TM, 1)          int32  token ids for this tile
    ew_ref:  (ntoken, ntoken) bf16   fused table EW = emb @ W_dec^T (resident)
    b_ref:   (1, ntoken)      f32    decoder bias
    out_ref: (TM, ntoken)     f32    softmax probabilities
    """
    ids = ids_ref[...]                                   # (TM, 1) int32
    tm = ids.shape[0]
    ntoken = ew_ref.shape[0]

    # Embedding lookup + decoder fused: logits[r] = EW[ids[r]] + b, realized as
    # a one-hot matmul (MXU-friendly; 0/1 is exact in bf16, contraction K=ntoken).
    col = lax.broadcasted_iota(jnp.int32, (tm, ntoken), 1)
    onehot = (col == ids).astype(jnp.bfloat16)           # (TM, ntoken) bf16

    logits = jnp.dot(onehot, ew_ref[...],
                     preferred_element_type=jnp.float32)  # (TM, ntoken) f32
    logits = logits + b_ref[...]                          # broadcast (1, ntoken)

    # Numerically-stable softmax over the lane (last) dim, EXACT normalization
    # so rows sum to 1 to f32 rounding.
    m = jnp.max(logits, axis=-1, keepdims=True)
    e = jnp.exp(logits - m)
    s = jnp.sum(e, axis=-1, keepdims=True)
    out_ref[...] = e / s


@functools.partial(jax.jit, static_argnames=("tm",))
def encoder_decoder_forward(x, emb, w, b, *, tm=None):
    """x: (batch, seq) int token ids -> (batch, seq, ntoken) f32 softmax probs.

    emb: (ntoken, ninp) encoder.weight; w: (ntoken, ninp) decoder.weight;
    b: (ntoken,) decoder.bias.
    """
    batch, seq = x.shape
    ntoken, ninp = emb.shape
    n = batch * seq

    budget = _vmem_budget_bytes()

    # Row tile: default 512 (near the HBM writeback roofline), clamped to the
    # padded row count, multiple of 8 sublanes, shrunk to fit the VMEM budget.
    if tm is None:
        tm = 512
    tm = max(8, min(int(tm), _round_up(n, 8)))
    tm = _round_up(tm, 8)
    while tm > 8 and _step_vmem_bytes(tm, ntoken) > budget:
        tm = max(8, _round_up(tm // 2, 8))
    n_pad = _round_up(n, tm)

    ids = x.reshape(n).astype(jnp.int32)
    if n_pad != n:
        ids = jnp.pad(ids, (0, n_pad - n))                # pad with token 0; sliced off below
    ids = ids.reshape(n_pad, 1)

    # One-time weight prep (hoisted out of the kernel): fuse encoder and
    # decoder into EW = emb @ W_dec^T (f32 accumulate), then cast once to bf16
    # for the MXU.  Bias stays f32.
    ew = jnp.dot(emb.astype(jnp.float32),
                 jnp.transpose(w).astype(jnp.float32),
                 preferred_element_type=jnp.float32).astype(jnp.bfloat16)  # (ntoken, ntoken)
    b2d = b.reshape(1, ntoken).astype(jnp.float32)

    # With dimension_semantics=("parallel",) the row-tile grid shards across
    # v7x's 2 TensorCores; each TC keeps its own resident EW copy, which the
    # per-generation budget above already accommodates at these sizes.
    out = pl.pallas_call(
        enc_dec_kernel,
        out_shape=jax.ShapeDtypeStruct((n_pad, ntoken), jnp.float32),
        grid_spec=pltpu.PrefetchScalarGridSpec(
            num_scalar_prefetch=0,
            grid=(n_pad // tm,),
            in_specs=[
                pl.BlockSpec((tm, 1), lambda i: (i, 0)),        # ids tile
                pl.BlockSpec((ntoken, ntoken), lambda i: (0, 0)),  # fused EW (resident)
                pl.BlockSpec((1, ntoken), lambda i: (0, 0)),       # decoder bias
            ],
            out_specs=pl.BlockSpec((tm, ntoken), lambda i: (i, 0)),
        ),
        compiler_params=pltpu.CompilerParams(
            dimension_semantics=("parallel",),
            vmem_limit_bytes=budget,
        ),
    )(ids, ew, b2d)

    return out[:n].reshape(batch, seq, ntoken)


if __name__ == "__main__":
    # Small shapes consistent with the module: ntoken vocab, ninp embedding dim.
    ntoken, ninp = 128, 32
    batch, seq = 2, 8

    key = jax.random.PRNGKey(0)
    k_emb, k_w, k_x = jax.random.split(key, 3)

    # Deterministic init mirroring EncoderDecoderModule.init_weights():
    #   uniform(-0.1, 0.1) for encoder.weight and decoder.weight, zeros for bias.
    initrange = 0.1
    emb = jax.random.uniform(k_emb, (ntoken, ninp), jnp.float32,
                             minval=-initrange, maxval=initrange)
    w = jax.random.uniform(k_w, (ntoken, ninp), jnp.float32,
                           minval=-initrange, maxval=initrange)
    b = jnp.zeros((ntoken,), jnp.float32)

    x = jax.random.randint(k_x, (batch, seq), 0, ntoken, dtype=jnp.int32)

    out = encoder_decoder_forward(x, emb, w, b)
    out = jax.block_until_ready(out)

    # Pure-JAX f32 reference of the same forward pass.  Tolerances account for
    # the one-time bf16 quantization of the fused EW table.
    mid_ref = emb[x]                                    # (batch, seq, ninp)
    logits_ref = mid_ref @ w.T + b                      # (batch, seq, ntoken)
    probs_ref = jax.nn.softmax(logits_ref, axis=-1)

    assert out.shape == (batch, seq, ntoken)
    assert bool(jnp.all(jnp.isfinite(out)))
    assert jnp.allclose(jnp.sum(out, axis=-1), 1.0, atol=1e-4)
    assert jnp.allclose(out, probs_ref, atol=1e-3, rtol=1e-2)

    print("KERNEL_OK")
</pallas_src>

<mosaic_0001>
module attributes {stable_mosaic.version = 11 : i64} {
  func.func @enc_dec_kernel(%arg0: i32, %arg1: memref<16x1xi32, #tpu.memory_space<vmem>>, %arg2: memref<128x128xbf16, #tpu.memory_space<vmem>>, %arg3: memref<1x128xf32, #tpu.memory_space<vmem>>, %arg4: memref<16x128xf32, #tpu.memory_space<vmem>>) attributes {dimension_semantics = [#tpu.dimension_semantics<parallel>], iteration_bounds = array<i64: 1>, scalar_prefetch = 0 : i64, scratch_operands = 0 : i64, tpu.core_type = #tpu.core_type<tc>, window_params = [{transform_indices = @transform_0, window_bounds = array<i64: 16, 1>}, {pipeline_mode = #tpu.pipeline_mode<synchronous>, transform_indices = @transform_1, window_bounds = array<i64: 128, 128>}, {pipeline_mode = #tpu.pipeline_mode<synchronous>, transform_indices = @transform_2, window_bounds = array<i64: 1, 128>}, {transform_indices = @transform_3, window_bounds = array<i64: 16, 128>}]} {
    %c0 = arith.constant 0 : index
    %c0_0 = arith.constant 0 : index
    %0 = vector.load %arg1[%c0, %c0_0] : memref<16x1xi32, #tpu.memory_space<vmem>>, vector<16x1xi32>
    %1 = tpu.iota {dimensions = array<i32: 1>} : vector<16x128xi32>
    %2 = vector.broadcast %0 : vector<16x1xi32> to vector<16x128xi32>
    %3 = arith.cmpi eq, %1, %2 : vector<16x128xi32>
    %4 = arith.extui %3 : vector<16x128xi1> to vector<16x128xi32>
    %5 = arith.sitofp %4 : vector<16x128xi32> to vector<16x128xf32>
    %6 = arith.truncf %5 : vector<16x128xf32> to vector<16x128xbf16>
    %c0_1 = arith.constant 0 : index
    %c0_2 = arith.constant 0 : index
    %7 = vector.load %arg2[%c0_1, %c0_2] : memref<128x128xbf16, #tpu.memory_space<vmem>>, vector<128x128xbf16>
    %cst = arith.constant dense<0.000000e+00> : vector<16x128xf32>
    %8 = tpu.matmul %6, %7, %cst {dimension_numbers = #tpu.dot_dimension_numbers<[1], [0], [0], [1], [0, 0, 1, 1], [], []>} : vector<16x128xbf16>, vector<128x128xbf16>, vector<16x128xf32> -> vector<16x128xf32>
    %c0_3 = arith.constant 0 : index
    %c0_4 = arith.constant 0 : index
    %9 = vector.load %arg3[%c0_3, %c0_4] : memref<1x128xf32, #tpu.memory_space<vmem>>, vector<1x128xf32>
    %10 = vector.broadcast %9 : vector<1x128xf32> to vector<16x128xf32>
    %11 = arith.addf %8, %10 : vector<16x128xf32>
    %cst_5 = arith.constant dense<0xFF800000> : vector<16xf32>
    %12 = vector.multi_reduction <maximumf>, %11, %cst_5 [1] : vector<16x128xf32> to vector<16xf32>
    %13 = vector.shape_cast %12 : vector<16xf32> to vector<16x1xf32>
    %14 = vector.broadcast %13 : vector<16x1xf32> to vector<16x128xf32>
    %15 = arith.subf %11, %14 : vector<16x128xf32>
    %16 = math.exp %15 : vector<16x128xf32>
    %cst_6 = arith.constant dense<0.000000e+00> : vector<16xf32>
    %17 = vector.multi_reduction <add>, %16, %cst_6 [1] : vector<16x128xf32> to vector<16xf32>
    %18 = vector.shape_cast %17 : vector<16xf32> to vector<16x1xf32>
    %19 = vector.broadcast %18 : vector<16x1xf32> to vector<16x128xf32>
    %20 = arith.divf %16, %19 : vector<16x128xf32>
    %c0_7 = arith.constant 0 : index
    %c0_8 = arith.constant 0 : index
    %21 = vector.load %arg4[%c0_7, %c0_8] : memref<16x128xf32, #tpu.memory_space<vmem>>, vector<16x128xf32>
    tpu.vector_store %arg4[%c0_7, %c0_8], %20 {strides = array<i32>} : memref<16x128xf32, #tpu.memory_space<vmem>>, vector<16x128xf32>,
    return
  }
  func.func @transform_0(%arg0: i32) -> (i32, i32) {
    %c0_i32 = arith.constant 0 : i32
    %c0_i32_0 = arith.constant 0 : i32
    return %arg0, %c0_i32 : i32, i32
  }
  func.func @transform_1(%arg0: i32) -> (i32, i32) {
    %c0_i32 = arith.constant 0 : i32
    %c0_i32_0 = arith.constant 0 : i32
    %c0_i32_1 = arith.constant 0 : i32
    return %c0_i32, %c0_i32_0 : i32, i32
  }
  func.func @transform_2(%arg0: i32) -> (i32, i32) {
    %c0_i32 = arith.constant 0 : i32
    %c0_i32_0 = arith.constant 0 : i32
    %c0_i32_1 = arith.constant 0 : i32
    return %c0_i32, %c0_i32_0 : i32, i32
  }
  func.func @transform_3(%arg0: i32) -> (i32, i32) {
    %c0_i32 = arith.constant 0 : i32
    %c0_i32_0 = arith.constant 0 : i32
    return %arg0, %c0_i32 : i32, i32
  }
}

</mosaic_0001>

<llo_original>
// kernel: encoder_decoder_forward.1
$region0: #{encoder_decoder_forward.1}
  #allocation0 [shape = 'u32[]', space=smem, size = 0x4, offset = 0x4, fixed_abs, tag = 'smem constant byte address 0x4 - core index']
  #allocation1 [shape = 'u32[144,128]{1,0:T(1,128)}', space=vmem, size = 0x12000, scoped, tag = 'internal scratch']
  %s0 = inlined_call_operand.vmem [shape: s32[16,1], index: 0, kind: input, shape index: {}]
  %s1 = inlined_call_operand.vmem [shape: bf16[128,128], index: 1, kind: input, shape index: {}]
  %s2 = inlined_call_operand.vmem [shape: f32[1,128], index: 2, kind: input, shape index: {}]
  %s3 = inlined_call_operand.hbm [shape: f32[16,128], index: 3, kind: output, shape index: {}]
  %s4 = sld [smem:[#allocation0]]
  $region22: #{encoder_decoder_forward.1} parent=0
    _
  %s6 = ssub.s32 1, %s4
  %s7 = scalar_select 0, %s6, %s4
  $region1: #{encoder_decoder_forward.1} parent=0
    #allocation2 [shape = 'u8[8192]{0}', space=vmem, size = 0x2000, scoped, tag = 'output window, operand 0, single buffered']
    #allocation3 [shape = 's32[1]{0}', space=sflag, size = 0x4, scoped, tag = 'scoped memory for encoder_decoder_forward.1']
    %8 = vsyncpa [#allocation3], 0
    // Predicated region
    $region2: #{encoder_decoder_forward.1} parent=1 // pred_check
      _
    $region3: #{encoder_decoder_forward.1} parent=1 // pred_check_branch
      %10 = sbr.rel (0) target = $region5
    $region4: #{encoder_decoder_forward.1} parent=1 // pred_region
      _
    $region5: #{encoder_decoder_forward.1} parent=1 // pred_fallthru
      _
    // Predicated region
    $region6: #{encoder_decoder_forward.1} parent=1 // pred_check
      _
    $region7: #{encoder_decoder_forward.1} parent=1 // pred_check_branch
      %12 = sbr.rel (0) target = $region9
    $region8: #{encoder_decoder_forward.1} parent=1 // pred_region
      _
    $region9: #{encoder_decoder_forward.1} parent=1 // pred_fallthru
      _
    // Predicated region
    $region10: #{encoder_decoder_forward.1} parent=1 // pred_check
      _
    $region11: #{encoder_decoder_forward.1} parent=1 // pred_check_branch
      %14 = sbr.rel (0) target = $region13
    $region12: #{encoder_decoder_forward.1} parent=1 // pred_region
      _
    $region13: #{encoder_decoder_forward.1} parent=1 // pred_fallthru
      _
    %v16 = vld [vmem:[%s0] sm:$0xff]
    %v17 = vld [vmem:[%s0 + $0x8] sm:$0xff]
    %v18 = vlaneseq
    %v19 = vand.u32 %v18, 127
    %20 = vset.pattern.permute.xlu0 0
    %21 = vperm.xlu0 %20, %v16
    %v22 = vpop.permute.xlu0 %21
    %23 = vset.pattern.permute.xlu0 0
    %24 = vperm.xlu0 %23, %v17
    %v25 = vpop.permute.xlu0 %24
    %vm26 = vcmp.eq.s32.totalorder %v19, %v22
    %vm27 = vcmp.eq.s32.totalorder %v19, %v25
    %v28 = vsel %vm26, 1, 0
    %v29 = vsel %vm27, 1, 0
    %v30 = vcvt.s32.f32 %v28
    %v31 = vcvt.s32.f32 %v29
    %v32 = vpack.c.bf16 %v31, %v30
    %v33 = vld [vmem:[%s1] sm:$0xf]
    %v34 = vld [vmem:[%s1 + $0x4] sm:$0xf]
    %v35 = vld [vmem:[%s1 + $0x8] sm:$0xf]
    %v36 = vld [vmem:[%s1 + $0xc] sm:$0xf]
    %v37 = vld [vmem:[%s1 + $0x10] sm:$0xf]
    %v38 = vld [vmem:[%s1 + $0x14] sm:$0xf]
    %v39 = vld [vmem:[%s1 + $0x18] sm:$0xf]
    %v40 = vld [vmem:[%s1 + $0x1c] sm:$0xf]
    %v41 = vld [vmem:[%s1 + $0x20] sm:$0xf]
    %v42 = vld [vmem:[%s1 + $0x24] sm:$0xf]
    %v43 = vld [vmem:[%s1 + $0x28] sm:$0xf]
    %v44 = vld [vmem:[%s1 + $0x2c] sm:$0xf]
    %v45 = vld [vmem:[%s1 + $0x30] sm:$0xf]
    %v46 = vld [vmem:[%s1 + $0x34] sm:$0xf]
    %v47 = vld [vmem:[%s1 + $0x38] sm:$0xf]
    %v48 = vld [vmem:[%s1 + $0x3c] sm:$0xf]
    %v49 = vld [vmem:[%s2] sm:$0x1]
    %v51 = vlaneseq
    %v52 = vshrl.u32 %v51, 7
    %v53 = vsub.s32 0, %v52
    %v54 = vrot.slane %v49, %v53
    %v72 = vunpack.c.l.b16 %v33
    %v73 = vunpack.c.l.b16 %v34
    %v74 = vunpack.c.l.b16 %v35
    %v75 = vunpack.c.l.b16 %v36
    %v76 = vunpack.c.l.b16 %v37
    %v77 = vunpack.c.l.b16 %v38
    %v78 = vunpack.c.l.b16 %v39
    %v79 = vunpack.c.l.b16 %v40
    %v80 = vunpack.c.l.b16 %v41
    %v81 = vunpack.c.l.b16 %v42
    %v82 = vunpack.c.l.b16 %v43
    %v83 = vunpack.c.l.b16 %v44
    %v84 = vunpack.c.l.b16 %v45
    %v85 = vunpack.c.l.b16 %v46
    %v86 = vunpack.c.l.b16 %v47
    %v87 = vunpack.c.l.b16 %v48
    %v88 = vpack.c.b16 %v73, %v72
    %v89 = vpack.c.b16 %v75, %v74
    %v90 = vpack.c.b16 %v77, %v76
    %v91 = vpack.c.b16 %v79, %v78
    %v92 = vpack.c.b16 %v81, %v80
    %v93 = vpack.c.b16 %v83, %v82
    %v94 = vpack.c.b16 %v85, %v84
    %v95 = vpack.c.b16 %v87, %v86
    %104 = vmatprep.subr.bf16.mxu0 0
    %105 = vmatpush1.bf16.msra.mxu0 %v88
    %106 = vmatprep.subr.bf16.mxu0 0
    %107 = vmatpush1.bf16.msra.mxu0 %v89
    %108 = vmatprep.subr.bf16.mxu0 0
    %109 = vmatpush1.bf16.msra.mxu0 %v90
    %110 = vmatprep.subr.bf16.mxu0 0
    %111 = vmatpush1.bf16.msra.mxu0 %v91
    %112 = vmatprep.subr.bf16.mxu0 0
    %113 = vmatpush1.bf16.msra.mxu0 %v92
    %114 = vmatprep.subr.bf16.mxu0 0
    %115 = vmatpush1.bf16.msra.mxu0 %v93
    %116 = vmatprep.subr.bf16.mxu0 0
    %117 = vmatpush1.bf16.msra.mxu0 %v94
    %118 = vmatprep.subr.bf16.mxu0 0
    %119 = vmatpush1.bf16.msra.mxu0 %v95
    %120 = vmatprep.subr.bf16.mxu0 0
    %121 = vmatpush1.bf16.msra.mxu0 0
    %122 = vmatprep.subr.bf16.mxu0 0
    %123 = vmatpush1.bf16.msra.mxu0 0
    %124 = vmatprep.subr.bf16.mxu0 0
    %125 = vmatpush1.bf16.msra.mxu0 0
    %126 = vmatprep.subr.bf16.mxu0 0
    %127 = vmatpush1.bf16.msra.mxu0 0
    %128 = vmatprep.subr.bf16.mxu0 0
    %129 = vmatpush1.bf16.msra.mxu0 0
    %130 = vmatprep.subr.bf16.mxu0 0
    %131 = vmatpush1.bf16.msra.mxu0 0
    %132 = vmatprep.subr.bf16.mxu0 0
    %133 = vmatpush1.bf16.msra.mxu0 0
    %134 = vmatprep.subr.bf16.mxu0 0
    %135 = vmatpush1.bf16.msra.mxu0 0
    %136 = vmatprep.mubr.bf16.mxu0 0
    %137 = vmatmul.mubr.bf16.gmra.mrb[0].mxu0 %v32
    %v138 = vpop.f32.mrb[0].mxu0
    %v139 = vadd.f32 %v54, %v138
    %v140 = vpop.f32.mrb[0].mxu0
    %v141 = vpop.f32.mrb[0].mxu0
    %v142 = vadd.f32 %v54, %v141
    %v143 = vpop.f32.mrb[0].mxu0
    %144 = vdwg.mxu0
    %145 = vmax.xlane.f32.xlu0 %v139
    %v146 = vpop.xlane.xlu0 %145
    %147 = vmax.xlane.f32.xlu0 %v142
    %v148 = vpop.xlane.xlu0 %147
    %v149 = vsub.f32 %v139, %v146
    %v150 = vsub.f32 %v142, %v148
    %v151 = vmul.f32 %v149, 1.442695
    %v152 = vpow.pop %v151
    %v153 = vmul.f32 %v150, 1.442695
    %v154 = vpow.pop %v153
    %155 = vadd.xlane.f32.xlu0 %v152
    %v156 = vpop.xlane.xlu0 %155
    %157 = vadd.xlane.f32.xlu0 %v154
    %v158 = vpop.xlane.xlu0 %157
    %v159 = vrcp.pop %v156
    %v160 = vmul.f32 %v152, %v159
    %v161 = vrcp.pop %v158
    %v162 = vmul.f32 %v154, %v161
    %163 = vst [vmem:[#allocation2] sm:$0xff] %v160
    %164 = vst [vmem:[#allocation2 + $0x8] sm:$0xff] %v162
    // Predicated region
    $region14: #{encoder_decoder_forward.1} parent=1 // pred_check
      _
    $region15: #{encoder_decoder_forward.1} parent=1 // pred_check_branch
      %166 = sbr.rel (0) target = $region17
    $region16: #{encoder_decoder_forward.1} parent=1 // pred_region
      %s168 = ssub.s32 256, 256
      %169 = vsyncadd [#allocation3], %s168
      %s170 = sshll.u32 [#allocation2], 4
      %s171 = int_to_ptr.vmem [resolvable:$true] %s170
      %176 = dma.vmem_to_hbm [thread:$0]  %s171, 256, %s3, [#allocation3], 128, 128, 8
    $region17: #{encoder_decoder_forward.1} parent=1 // pred_fallthru
      _
    // Predicated region
    $region18: #{encoder_decoder_forward.1} parent=1 // pred_check
      _
    $region19: #{encoder_decoder_forward.1} parent=1 // pred_check_branch
      %178 = sbr.rel (0) target = $region21
    $region20: #{encoder_decoder_forward.1} parent=1 // pred_region
      %179 = dma.done [#allocation3], 256
    $region21: #{encoder_decoder_forward.1} parent=1 // pred_fallthru
      _
    %180 = vsyncpa [#allocation3], 1

</llo_original>
